<compile_context>
chip_gen: v7x
topology: tpu7x:2x2x1
jax: 0.10.0
libtpu: 0.0.40
codegen_flags: <defaults>
</compile_context>

<pallas_src>
import math
import functools

import jax
import jax.numpy as jnp
from jax import lax
from jax.experimental import pallas as pl
from jax.experimental.pallas import tpu as pltpu


def _bilstm_kernel(x2d_ref, Wpair_ref, Ublk_ref, bias_ref,
                   hseq_ref, cfin_ref,
                   gx_ref):
    n_rows, twoG = gx_ref.shape            # (seq*bsp, 8*HS)
    bsp, HS2 = cfin_ref.shape              # (8-padded batch, 2*HS)
    seq = n_rows // bsp

    # Hoisted input projection for BOTH directions and ALL timesteps:
    # one MXU GEMM, written straight into the single gx VMEM scratch.
    # Column layout is gate-major / direction-minor: [i_f i_b f_f f_b g_f g_b o_f o_b].
    gx_ref[...] = (jnp.dot(x2d_ref[...], Wpair_ref[...],
                           preferred_element_type=jnp.float32)
                   + bias_ref[...])

    # Loop-invariant recurrent weight: load once, keep resident.
    Ublk = Ublk_ref[...]                   # (2*HS, 8*HS), lane-block-diagonal

    def step(t, carry):
        h, c = carry                       # (bsp, 2*HS) each: [fwd | bwd] lanes
        row = pl.multiple_of(t * bsp, bsp)             # sublane-tile aligned
        gx_t = gx_ref[pl.ds(row, bsp), :]              # (bsp, 8*HS)
        # One recurrent matmul for both directions (block-diag Ublk ⇒ exact).
        gates = gx_t + jnp.dot(h, Ublk, preferred_element_type=jnp.float32)
        sg = jax.nn.sigmoid(gates)         # one EUP pass covers both directions
        tg = jnp.tanh(gates)
        i_t = sg[:, 0 * HS2:1 * HS2]       # [i_f | i_b]  — aligned with c/h layout
        f_t = sg[:, 1 * HS2:2 * HS2]
        g_t = tg[:, 2 * HS2:3 * HS2]
        o_t = sg[:, 3 * HS2:4 * HS2]
        c_new = f_t * c + i_t * g_t
        h_new = o_t * jnp.tanh(c_new)
        # hidden_seq[t] = [fwd hidden after step t | bwd hidden after iteration t]
        # — same pairing as the PyTorch zip(forward_list, backward_list).
        # No concatenate needed: h_new already has that lane layout.
        hseq_ref[pl.ds(row, bsp), :] = h_new
        return h_new, c_new

    z = jnp.zeros((bsp, HS2), dtype=jnp.float32)
    h_fin, c_fin = lax.fori_loop(0, seq, step, (z, z), unroll=min(seq, 8))
    # Single final-state write after the loop (fwd cell state in lanes [:HS]).
    cfin_ref[...] = c_fin


def bilstm_forward(x, params):
    """x: (batch, seq, input_sz) float32. Returns (hidden_seq, (h_t, c_t))."""
    bs, seq, in_sz = x.shape
    HS = params["Wf"].shape[1] // 4
    G = 4 * HS
    bsp = ((bs + 7) // 8) * 8              # pad batch to one sublane tile

    # --- one-time parameter repack (off the hot path) ------------------------
    def interleave_cols(Mf, Mb):
        # gate-major / direction-minor columns: [i_f i_b f_f f_b g_f g_b o_f o_b]
        r = Mf.shape[0]
        return jnp.stack([Mf.reshape(r, 4, HS), Mb.reshape(r, 4, HS)],
                         axis=2).reshape(r, 8 * HS)

    zW = jnp.zeros_like(params["Wf"])
    Wpair = jnp.concatenate([interleave_cols(params["Wf"], zW),
                             interleave_cols(jnp.zeros_like(params["Wb"]),
                                             params["Wb"])], axis=0)  # (2*in, 8*HS)
    zU = jnp.zeros_like(params["Uf"])
    Ublk = jnp.concatenate([interleave_cols(params["Uf"], zU),
                            interleave_cols(jnp.zeros_like(params["Ub"]),
                                            params["Ub"])], axis=0)   # (2*HS, 8*HS)
    bias = jnp.stack([params["bf"].reshape(4, HS),
                      params["bb"].reshape(4, HS)], axis=1).reshape(1, 8 * HS)

    # Step-paired input slab: row block t carries x[:, t, :] (fwd half) and
    # x[:, seq-1-t, :] (bwd half); the backward time reversal is folded in here,
    # off the recurrent critical path. (x is tiny; this is a one-time copy.)
    x_tm = jnp.transpose(x, (1, 0, 2))                                 # (seq, bs, in)
    xpair = jnp.concatenate([x_tm, x_tm[::-1]], axis=-1)               # (seq, bs, 2*in)
    xpair = jnp.pad(xpair, ((0, 0), (0, bsp - bs), (0, 0)))            # (seq, bsp, 2*in)
    x2d = xpair.reshape(seq * bsp, 2 * in_sz)

    # Explicit scoped-VMEM budget derived from the resident slabs.
    f32b = 4
    resident = (x2d.size + Wpair.size + Ublk.size + bias.size
                + seq * bsp * 2 * G              # gx scratch
                + seq * bsp * 2 * HS             # hidden-seq output
                + bsp * 2 * HS) * f32b           # final-state output
    vmem_limit = int(min(max(4 * resident, 16 * 1024 * 1024), 48 * 1024 * 1024))

    hseq2d, cfin = pl.pallas_call(
        _bilstm_kernel,
        out_shape=[
            jax.ShapeDtypeStruct((seq * bsp, 2 * HS), jnp.float32),  # per-step hidden
            jax.ShapeDtypeStruct((bsp, 2 * HS), jnp.float32),        # final cell state
        ],
        scratch_shapes=[
            pltpu.VMEM((seq * bsp, 2 * G), jnp.float32),             # fused gx slab
        ],
        compiler_params=pltpu.CompilerParams(vmem_limit_bytes=vmem_limit),
    )(x2d, Wpair, Ublk, bias)

    hidden_seq = hseq2d.reshape(seq, bsp, 2 * HS)[:, :bs, :].transpose(1, 0, 2)
    h_t = hidden_seq[:, -1, :]             # = cat(final forward h, final backward h)
    # NOTE: the PyTorch module concatenates the forward cell state with itself
    # (its own quirk — the backward cell state is discarded); reproduced exactly.
    cfin_f = cfin[:bs, :HS]
    c_t = jnp.concatenate([cfin_f, cfin_f], axis=1)                    # (bs, 2*HS)
    return hidden_seq, (h_t, c_t)


def _reference_bilstm(x, params):
    """Pure-JAX reference replicating the PyTorch BLSTM semantics for validation."""
    bs, seq, _ = x.shape
    HS = params["Wf"].shape[1] // 4

    def cell(x_t, h, c, W, U, b):
        gates = x_t @ W + h @ U + b
        i = jax.nn.sigmoid(gates[:, :HS])
        f = jax.nn.sigmoid(gates[:, HS:2 * HS])
        g = jnp.tanh(gates[:, 2 * HS:3 * HS])
        o = jax.nn.sigmoid(gates[:, 3 * HS:])
        c = f * c + i * g
        h = o * jnp.tanh(c)
        return h, c

    hf = jnp.zeros((bs, HS)); cf = jnp.zeros((bs, HS))
    hb = jnp.zeros((bs, HS)); cb = jnp.zeros((bs, HS))
    fwd, bwd = [], []
    for t in range(seq):
        hf, cf = cell(x[:, t, :], hf, cf, params["Wf"], params["Uf"], params["bf"])
        fwd.append(hf)
    for t in reversed(range(seq)):
        hb, cb = cell(x[:, t, :], hb, cb, params["Wb"], params["Ub"], params["bb"])
        bwd.append(hb)
    h_t = jnp.concatenate([hf, hb], axis=1)
    c_t = jnp.concatenate([cf, cf], axis=1)
    hidden_seq = jnp.stack([jnp.concatenate([f, b], axis=1) for f, b in zip(fwd, bwd)], axis=0)
    hidden_seq = jnp.transpose(hidden_seq, (1, 0, 2))
    return hidden_seq, (h_t, c_t)


def make_params(key, input_sz, hidden_sz):
    stdv = 1.0 / math.sqrt(hidden_sz)
    keys = jax.random.split(key, 6)
    u = functools.partial(jax.random.uniform, minval=-stdv, maxval=stdv,
                          dtype=jnp.float32)
    return {
        "Wf": u(keys[0], (input_sz, 4 * hidden_sz)),
        "Uf": u(keys[1], (hidden_sz, 4 * hidden_sz)),
        "bf": u(keys[2], (4 * hidden_sz,)),
        "Wb": u(keys[3], (input_sz, 4 * hidden_sz)),
        "Ub": u(keys[4], (hidden_sz, 4 * hidden_sz)),
        "bb": u(keys[5], (4 * hidden_sz,)),
    }


if __name__ == "__main__":
    batch, seq, input_sz, hidden_sz = 2, 8, 16, 32

    root = jax.random.PRNGKey(0)
    k_x, k_p = jax.random.split(root)
    x = jax.random.normal(k_x, (batch, seq, input_sz), dtype=jnp.float32)
    params = make_params(k_p, input_sz, hidden_sz)

    hidden_seq, (h_t, c_t) = bilstm_forward(x, params)
    jax.block_until_ready((hidden_seq, h_t, c_t))

    ref_seq, (ref_h, ref_c) = _reference_bilstm(x, params)
    assert hidden_seq.shape == (batch, seq, 2 * hidden_sz)
    assert h_t.shape == (batch, 2 * hidden_sz) and c_t.shape == (batch, 2 * hidden_sz)
    assert jnp.allclose(hidden_seq, ref_seq, atol=1e-5, rtol=1e-5)
    assert jnp.allclose(h_t, ref_h, atol=1e-5, rtol=1e-5)
    assert jnp.allclose(c_t, ref_c, atol=1e-5, rtol=1e-5)

    print("KERNEL_OK")
</pallas_src>

<mosaic_0001>
module attributes {stable_mosaic.version = 11 : i64} {
  func.func @_bilstm_kernel(%arg0: memref<64x32xf32, #tpu.memory_space<vmem>>, %arg1: memref<32x256xf32, #tpu.memory_space<vmem>>, %arg2: memref<64x256xf32, #tpu.memory_space<vmem>>, %arg3: memref<1x256xf32, #tpu.memory_space<vmem>>, %arg4: memref<64x64xf32, #tpu.memory_space<vmem>>, %arg5: memref<8x64xf32, #tpu.memory_space<vmem>>, %arg6: memref<64x256xf32, #tpu.memory_space<vmem>>) attributes {dimension_semantics = [], scalar_prefetch = 0 : i64, scratch_operands = 1 : i64, tpu.core_type = #tpu.core_type<tc>} {
    %c0 = arith.constant 0 : index
    %c0_0 = arith.constant 0 : index
    %0 = vector.load %arg0[%c0, %c0_0] : memref<64x32xf32, #tpu.memory_space<vmem>>, vector<64x32xf32>
    %c0_1 = arith.constant 0 : index
    %c0_2 = arith.constant 0 : index
    %1 = vector.load %arg1[%c0_1, %c0_2] : memref<32x256xf32, #tpu.memory_space<vmem>>, vector<32x256xf32>
    %cst = arith.constant dense<0.000000e+00> : vector<64x256xf32>
    %2 = tpu.matmul %0, %1, %cst {dimension_numbers = #tpu.dot_dimension_numbers<[1], [0], [0], [1], [0, 0, 1, 1], [], []>} : vector<64x32xf32>, vector<32x256xf32>, vector<64x256xf32> -> vector<64x256xf32>
    %c0_3 = arith.constant 0 : index
    %c0_4 = arith.constant 0 : index
    %3 = vector.load %arg3[%c0_3, %c0_4] : memref<1x256xf32, #tpu.memory_space<vmem>>, vector<1x256xf32>
    %4 = vector.broadcast %3 : vector<1x256xf32> to vector<64x256xf32>
    %5 = arith.addf %2, %4 : vector<64x256xf32>
    %c0_5 = arith.constant 0 : index
    %c0_6 = arith.constant 0 : index
    %6 = vector.load %arg6[%c0_5, %c0_6] : memref<64x256xf32, #tpu.memory_space<vmem>>, vector<64x256xf32>
    tpu.vector_store %arg6[%c0_5, %c0_6], %5 {strides = array<i32>} : memref<64x256xf32, #tpu.memory_space<vmem>>, vector<64x256xf32>,
    %c0_7 = arith.constant 0 : index
    %c0_8 = arith.constant 0 : index
    %7 = vector.load %arg2[%c0_7, %c0_8] : memref<64x256xf32, #tpu.memory_space<vmem>>, vector<64x256xf32>
    %cst_9 = arith.constant 0.000000e+00 : f32
    %8 = vector.broadcast %cst_9 : f32 to vector<8x64xf32>
    %c0_i32 = arith.constant 0 : i32
    %c8_i32 = arith.constant 8 : i32
    %9 = arith.muli %c0_i32, %c8_i32 : i32
    %10 = tpu.assume_multiple %9, 8 : i32
    %11 = arith.index_cast %10 : i32 to index
    %c0_10 = arith.constant 0 : index
    %12 = vector.load %arg6[%11, %c0_10] : memref<64x256xf32, #tpu.memory_space<vmem>>, vector<8x256xf32>
    %cst_11 = arith.constant dense<0.000000e+00> : vector<8x256xf32>
    %13 = tpu.matmul %8, %7, %cst_11 {dimension_numbers = #tpu.dot_dimension_numbers<[1], [0], [0], [1], [0, 0, 1, 1], [], []>} : vector<8x64xf32>, vector<64x256xf32>, vector<8x256xf32> -> vector<8x256xf32>
    %14 = arith.addf %12, %13 : vector<8x256xf32>
    %15 = arith.negf %14 : vector<8x256xf32>
    %16 = math.exp %15 : vector<8x256xf32>
    %cst_12 = arith.constant 1.000000e+00 : f32
    %17 = vector.broadcast %cst_12 : f32 to vector<8x256xf32>
    %18 = arith.addf %17, %16 : vector<8x256xf32>
    %19 = arith.divf %17, %18 : vector<8x256xf32>
    %20 = math.tanh %14 : vector<8x256xf32>
    %21 = vector.extract_strided_slice %19 {offsets = [0, 0], sizes = [8, 64], strides = [1, 1]} : vector<8x256xf32> to vector<8x64xf32>
    %22 = vector.extract_strided_slice %19 {offsets = [0, 64], sizes = [8, 64], strides = [1, 1]} : vector<8x256xf32> to vector<8x64xf32>
    %23 = vector.extract_strided_slice %20 {offsets = [0, 128], sizes = [8, 64], strides = [1, 1]} : vector<8x256xf32> to vector<8x64xf32>
    %24 = vector.extract_strided_slice %19 {offsets = [0, 192], sizes = [8, 64], strides = [1, 1]} : vector<8x256xf32> to vector<8x64xf32>
    %25 = arith.mulf %22, %8 : vector<8x64xf32>
    %26 = arith.mulf %21, %23 : vector<8x64xf32>
    %27 = arith.addf %25, %26 : vector<8x64xf32>
    %28 = math.tanh %27 : vector<8x64xf32>
    %29 = arith.mulf %24, %28 : vector<8x64xf32>
    %30 = arith.index_cast %10 : i32 to index
    %c0_13 = arith.constant 0 : index
    %31 = vector.load %arg4[%30, %c0_13] : memref<64x64xf32, #tpu.memory_space<vmem>>, vector<8x64xf32>
    tpu.vector_store %arg4[%30, %c0_13], %29 {strides = array<i32>} : memref<64x64xf32, #tpu.memory_space<vmem>>, vector<8x64xf32>,
    %c1_i32 = arith.constant 1 : i32
    %c8_i32_14 = arith.constant 8 : i32
    %32 = arith.muli %c1_i32, %c8_i32_14 : i32
    %33 = tpu.assume_multiple %32, 8 : i32
    %34 = arith.index_cast %33 : i32 to index
    %c0_15 = arith.constant 0 : index
    %35 = vector.load %arg6[%34, %c0_15] : memref<64x256xf32, #tpu.memory_space<vmem>>, vector<8x256xf32>
    %cst_16 = arith.constant dense<0.000000e+00> : vector<8x256xf32>
    %36 = tpu.matmul %29, %7, %cst_16 {dimension_numbers = #tpu.dot_dimension_numbers<[1], [0], [0], [1], [0, 0, 1, 1], [], []>} : vector<8x64xf32>, vector<64x256xf32>, vector<8x256xf32> -> vector<8x256xf32>
    %37 = arith.addf %35, %36 : vector<8x256xf32>
    %38 = arith.negf %37 : vector<8x256xf32>
    %39 = math.exp %38 : vector<8x256xf32>
    %cst_17 = arith.constant 1.000000e+00 : f32
    %40 = vector.broadcast %cst_17 : f32 to vector<8x256xf32>
    %41 = arith.addf %40, %39 : vector<8x256xf32>
    %42 = arith.divf %40, %41 : vector<8x256xf32>
    %43 = math.tanh %37 : vector<8x256xf32>
    %44 = vector.extract_strided_slice %42 {offsets = [0, 0], sizes = [8, 64], strides = [1, 1]} : vector<8x256xf32> to vector<8x64xf32>
    %45 = vector.extract_strided_slice %42 {offsets = [0, 64], sizes = [8, 64], strides = [1, 1]} : vector<8x256xf32> to vector<8x64xf32>
    %46 = vector.extract_strided_slice %43 {offsets = [0, 128], sizes = [8, 64], strides = [1, 1]} : vector<8x256xf32> to vector<8x64xf32>
    %47 = vector.extract_strided_slice %42 {offsets = [0, 192], sizes = [8, 64], strides = [1, 1]} : vector<8x256xf32> to vector<8x64xf32>
    %48 = arith.mulf %45, %27 : vector<8x64xf32>
    %49 = arith.mulf %44, %46 : vector<8x64xf32>
    %50 = arith.addf %48, %49 : vector<8x64xf32>
    %51 = math.tanh %50 : vector<8x64xf32>
    %52 = arith.mulf %47, %51 : vector<8x64xf32>
    %53 = arith.index_cast %33 : i32 to index
    %c0_18 = arith.constant 0 : index
    %54 = vector.load %arg4[%53, %c0_18] : memref<64x64xf32, #tpu.memory_space<vmem>>, vector<8x64xf32>
    tpu.vector_store %arg4[%53, %c0_18], %52 {strides = array<i32>} : memref<64x64xf32, #tpu.memory_space<vmem>>, vector<8x64xf32>,
    %c2_i32 = arith.constant 2 : i32
    %c8_i32_19 = arith.constant 8 : i32
    %55 = arith.muli %c2_i32, %c8_i32_19 : i32
    %56 = tpu.assume_multiple %55, 8 : i32
    %57 = arith.index_cast %56 : i32 to index
    %c0_20 = arith.constant 0 : index
    %58 = vector.load %arg6[%57, %c0_20] : memref<64x256xf32, #tpu.memory_space<vmem>>, vector<8x256xf32>
    %cst_21 = arith.constant dense<0.000000e+00> : vector<8x256xf32>
    %59 = tpu.matmul %52, %7, %cst_21 {dimension_numbers = #tpu.dot_dimension_numbers<[1], [0], [0], [1], [0, 0, 1, 1], [], []>} : vector<8x64xf32>, vector<64x256xf32>, vector<8x256xf32> -> vector<8x256xf32>
    %60 = arith.addf %58, %59 : vector<8x256xf32>
    %61 = arith.negf %60 : vector<8x256xf32>
    %62 = math.exp %61 : vector<8x256xf32>
    %cst_22 = arith.constant 1.000000e+00 : f32
    %63 = vector.broadcast %cst_22 : f32 to vector<8x256xf32>
    %64 = arith.addf %63, %62 : vector<8x256xf32>
    %65 = arith.divf %63, %64 : vector<8x256xf32>
    %66 = math.tanh %60 : vector<8x256xf32>
    %67 = vector.extract_strided_slice %65 {offsets = [0, 0], sizes = [8, 64], strides = [1, 1]} : vector<8x256xf32> to vector<8x64xf32>
    %68 = vector.extract_strided_slice %65 {offsets = [0, 64], sizes = [8, 64], strides = [1, 1]} : vector<8x256xf32> to vector<8x64xf32>
    %69 = vector.extract_strided_slice %66 {offsets = [0, 128], sizes = [8, 64], strides = [1, 1]} : vector<8x256xf32> to vector<8x64xf32>
    %70 = vector.extract_strided_slice %65 {offsets = [0, 192], sizes = [8, 64], strides = [1, 1]} : vector<8x256xf32> to vector<8x64xf32>
    %71 = arith.mulf %68, %50 : vector<8x64xf32>
    %72 = arith.mulf %67, %69 : vector<8x64xf32>
    %73 = arith.addf %71, %72 : vector<8x64xf32>
    %74 = math.tanh %73 : vector<8x64xf32>
    %75 = arith.mulf %70, %74 : vector<8x64xf32>
    %76 = arith.index_cast %56 : i32 to index
    %c0_23 = arith.constant 0 : index
    %77 = vector.load %arg4[%76, %c0_23] : memref<64x64xf32, #tpu.memory_space<vmem>>, vector<8x64xf32>
    tpu.vector_store %arg4[%76, %c0_23], %75 {strides = array<i32>} : memref<64x64xf32, #tpu.memory_space<vmem>>, vector<8x64xf32>,
    %c3_i32 = arith.constant 3 : i32
    %c8_i32_24 = arith.constant 8 : i32
    %78 = arith.muli %c3_i32, %c8_i32_24 : i32
    %79 = tpu.assume_multiple %78, 8 : i32
    %80 = arith.index_cast %79 : i32 to index
    %c0_25 = arith.constant 0 : index
    %81 = vector.load %arg6[%80, %c0_25] : memref<64x256xf32, #tpu.memory_space<vmem>>, vector<8x256xf32>
    %cst_26 = arith.constant dense<0.000000e+00> : vector<8x256xf32>
    %82 = tpu.matmul %75, %7, %cst_26 {dimension_numbers = #tpu.dot_dimension_numbers<[1], [0], [0], [1], [0, 0, 1, 1], [], []>} : vector<8x64xf32>, vector<64x256xf32>, vector<8x256xf32> -> vector<8x256xf32>
    %83 = arith.addf %81, %82 : vector<8x256xf32>
    %84 = arith.negf %83 : vector<8x256xf32>
    %85 = math.exp %84 : vector<8x256xf32>
    %cst_27 = arith.constant 1.000000e+00 : f32
    %86 = vector.broadcast %cst_27 : f32 to vector<8x256xf32>
    %87 = arith.addf %86, %85 : vector<8x256xf32>
    %88 = arith.divf %86, %87 : vector<8x256xf32>
    %89 = math.tanh %83 : vector<8x256xf32>
    %90 = vector.extract_strided_slice %88 {offsets = [0, 0], sizes = [8, 64], strides = [1, 1]} : vector<8x256xf32> to vector<8x64xf32>
    %91 = vector.extract_strided_slice %88 {offsets = [0, 64], sizes = [8, 64], strides = [1, 1]} : vector<8x256xf32> to vector<8x64xf32>
    %92 = vector.extract_strided_slice %89 {offsets = [0, 128], sizes = [8, 64], strides = [1, 1]} : vector<8x256xf32> to vector<8x64xf32>
    %93 = vector.extract_strided_slice %88 {offsets = [0, 192], sizes = [8, 64], strides = [1, 1]} : vector<8x256xf32> to vector<8x64xf32>
    %94 = arith.mulf %91, %73 : vector<8x64xf32>
    %95 = arith.mulf %90, %92 : vector<8x64xf32>
    %96 = arith.addf %94, %95 : vector<8x64xf32>
    %97 = math.tanh %96 : vector<8x64xf32>
    %98 = arith.mulf %93, %97 : vector<8x64xf32>
    %99 = arith.index_cast %79 : i32 to index
    %c0_28 = arith.constant 0 : index
    %100 = vector.load %arg4[%99, %c0_28] : memref<64x64xf32, #tpu.memory_space<vmem>>, vector<8x64xf32>
    tpu.vector_store %arg4[%99, %c0_28], %98 {strides = array<i32>} : memref<64x64xf32, #tpu.memory_space<vmem>>, vector<8x64xf32>,
    %c4_i32 = arith.constant 4 : i32
    %c8_i32_29 = arith.constant 8 : i32
    %101 = arith.muli %c4_i32, %c8_i32_29 : i32
    %102 = tpu.assume_multiple %101, 8 : i32
    %103 = arith.index_cast %102 : i32 to index
    %c0_30 = arith.constant 0 : index
    %104 = vector.load %arg6[%103, %c0_30] : memref<64x256xf32, #tpu.memory_space<vmem>>, vector<8x256xf32>
    %cst_31 = arith.constant dense<0.000000e+00> : vector<8x256xf32>
    %105 = tpu.matmul %98, %7, %cst_31 {dimension_numbers = #tpu.dot_dimension_numbers<[1], [0], [0], [1], [0, 0, 1, 1], [], []>} : vector<8x64xf32>, vector<64x256xf32>, vector<8x256xf32> -> vector<8x256xf32>
    %106 = arith.addf %104, %105 : vector<8x256xf32>
    %107 = arith.negf %106 : vector<8x256xf32>
    %108 = math.exp %107 : vector<8x256xf32>
    %cst_32 = arith.constant 1.000000e+00 : f32
    %109 = vector.broadcast %cst_32 : f32 to vector<8x256xf32>
    %110 = arith.addf %109, %108 : vector<8x256xf32>
    %111 = arith.divf %109, %110 : vector<8x256xf32>
    %112 = math.tanh %106 : vector<8x256xf32>
    %113 = vector.extract_strided_slice %111 {offsets = [0, 0], sizes = [8, 64], strides = [1, 1]} : vector<8x256xf32> to vector<8x64xf32>
    %114 = vector.extract_strided_slice %111 {offsets = [0, 64], sizes = [8, 64], strides = [1, 1]} : vector<8x256xf32> to vector<8x64xf32>
    %115 = vector.extract_strided_slice %112 {offsets = [0, 128], sizes = [8, 64], strides = [1, 1]} : vector<8x256xf32> to vector<8x64xf32>
    %116 = vector.extract_strided_slice %111 {offsets = [0, 192], sizes = [8, 64], strides = [1, 1]} : vector<8x256xf32> to vector<8x64xf32>
    %117 = arith.mulf %114, %96 : vector<8x64xf32>
    %118 = arith.mulf %113, %115 : vector<8x64xf32>
    %119 = arith.addf %117, %118 : vector<8x64xf32>
    %120 = math.tanh %119 : vector<8x64xf32>
    %121 = arith.mulf %116, %120 : vector<8x64xf32>
    %122 = arith.index_cast %102 : i32 to index
    %c0_33 = arith.constant 0 : index
    %123 = vector.load %arg4[%122, %c0_33] : memref<64x64xf32, #tpu.memory_space<vmem>>, vector<8x64xf32>
    tpu.vector_store %arg4[%122, %c0_33], %121 {strides = array<i32>} : memref<64x64xf32, #tpu.memory_space<vmem>>, vector<8x64xf32>,
    %c5_i32 = arith.constant 5 : i32
    %c8_i32_34 = arith.constant 8 : i32
    %124 = arith.muli %c5_i32, %c8_i32_34 : i32
    %125 = tpu.assume_multiple %124, 8 : i32
    %126 = arith.index_cast %125 : i32 to index
    %c0_35 = arith.constant 0 : index
    %127 = vector.load %arg6[%126, %c0_35] : memref<64x256xf32, #tpu.memory_space<vmem>>, vector<8x256xf32>
    %cst_36 = arith.constant dense<0.000000e+00> : vector<8x256xf32>
    %128 = tpu.matmul %121, %7, %cst_36 {dimension_numbers = #tpu.dot_dimension_numbers<[1], [0], [0], [1], [0, 0, 1, 1], [], []>} : vector<8x64xf32>, vector<64x256xf32>, vector<8x256xf32> -> vector<8x256xf32>
    %129 = arith.addf %127, %128 : vector<8x256xf32>
    %130 = arith.negf %129 : vector<8x256xf32>
    %131 = math.exp %130 : vector<8x256xf32>
    %cst_37 = arith.constant 1.000000e+00 : f32
    %132 = vector.broadcast %cst_37 : f32 to vector<8x256xf32>
    %133 = arith.addf %132, %131 : vector<8x256xf32>
    %134 = arith.divf %132, %133 : vector<8x256xf32>
    %135 = math.tanh %129 : vector<8x256xf32>
    %136 = vector.extract_strided_slice %134 {offsets = [0, 0], sizes = [8, 64], strides = [1, 1]} : vector<8x256xf32> to vector<8x64xf32>
    %137 = vector.extract_strided_slice %134 {offsets = [0, 64], sizes = [8, 64], strides = [1, 1]} : vector<8x256xf32> to vector<8x64xf32>
    %138 = vector.extract_strided_slice %135 {offsets = [0, 128], sizes = [8, 64], strides = [1, 1]} : vector<8x256xf32> to vector<8x64xf32>
    %139 = vector.extract_strided_slice %134 {offsets = [0, 192], sizes = [8, 64], strides = [1, 1]} : vector<8x256xf32> to vector<8x64xf32>
    %140 = arith.mulf %137, %119 : vector<8x64xf32>
    %141 = arith.mulf %136, %138 : vector<8x64xf32>
    %142 = arith.addf %140, %141 : vector<8x64xf32>
    %143 = math.tanh %142 : vector<8x64xf32>
    %144 = arith.mulf %139, %143 : vector<8x64xf32>
    %145 = arith.index_cast %125 : i32 to index
    %c0_38 = arith.constant 0 : index
    %146 = vector.load %arg4[%145, %c0_38] : memref<64x64xf32, #tpu.memory_space<vmem>>, vector<8x64xf32>
    tpu.vector_store %arg4[%145, %c0_38], %144 {strides = array<i32>} : memref<64x64xf32, #tpu.memory_space<vmem>>, vector<8x64xf32>,
    %c6_i32 = arith.constant 6 : i32
    %c8_i32_39 = arith.constant 8 : i32
    %147 = arith.muli %c6_i32, %c8_i32_39 : i32
    %148 = tpu.assume_multiple %147, 8 : i32
    %149 = arith.index_cast %148 : i32 to index
    %c0_40 = arith.constant 0 : index
    %150 = vector.load %arg6[%149, %c0_40] : memref<64x256xf32, #tpu.memory_space<vmem>>, vector<8x256xf32>
    %cst_41 = arith.constant dense<0.000000e+00> : vector<8x256xf32>
    %151 = tpu.matmul %144, %7, %cst_41 {dimension_numbers = #tpu.dot_dimension_numbers<[1], [0], [0], [1], [0, 0, 1, 1], [], []>} : vector<8x64xf32>, vector<64x256xf32>, vector<8x256xf32> -> vector<8x256xf32>
    %152 = arith.addf %150, %151 : vector<8x256xf32>
    %153 = arith.negf %152 : vector<8x256xf32>
    %154 = math.exp %153 : vector<8x256xf32>
    %cst_42 = arith.constant 1.000000e+00 : f32
    %155 = vector.broadcast %cst_42 : f32 to vector<8x256xf32>
    %156 = arith.addf %155, %154 : vector<8x256xf32>
    %157 = arith.divf %155, %156 : vector<8x256xf32>
    %158 = math.tanh %152 : vector<8x256xf32>
    %159 = vector.extract_strided_slice %157 {offsets = [0, 0], sizes = [8, 64], strides = [1, 1]} : vector<8x256xf32> to vector<8x64xf32>
    %160 = vector.extract_strided_slice %157 {offsets = [0, 64], sizes = [8, 64], strides = [1, 1]} : vector<8x256xf32> to vector<8x64xf32>
    %161 = vector.extract_strided_slice %158 {offsets = [0, 128], sizes = [8, 64], strides = [1, 1]} : vector<8x256xf32> to vector<8x64xf32>
    %162 = vector.extract_strided_slice %157 {offsets = [0, 192], sizes = [8, 64], strides = [1, 1]} : vector<8x256xf32> to vector<8x64xf32>
    %163 = arith.mulf %160, %142 : vector<8x64xf32>
    %164 = arith.mulf %159, %161 : vector<8x64xf32>
    %165 = arith.addf %163, %164 : vector<8x64xf32>
    %166 = math.tanh %165 : vector<8x64xf32>
    %167 = arith.mulf %162, %166 : vector<8x64xf32>
    %168 = arith.index_cast %148 : i32 to index
    %c0_43 = arith.constant 0 : index
    %169 = vector.load %arg4[%168, %c0_43] : memref<64x64xf32, #tpu.memory_space<vmem>>, vector<8x64xf32>
    tpu.vector_store %arg4[%168, %c0_43], %167 {strides = array<i32>} : memref<64x64xf32, #tpu.memory_space<vmem>>, vector<8x64xf32>,
    %c7_i32 = arith.constant 7 : i32
    %c8_i32_44 = arith.constant 8 : i32
    %170 = arith.muli %c7_i32, %c8_i32_44 : i32
    %171 = tpu.assume_multiple %170, 8 : i32
    %172 = arith.index_cast %171 : i32 to index
    %c0_45 = arith.constant 0 : index
    %173 = vector.load %arg6[%172, %c0_45] : memref<64x256xf32, #tpu.memory_space<vmem>>, vector<8x256xf32>
    %cst_46 = arith.constant dense<0.000000e+00> : vector<8x256xf32>
    %174 = tpu.matmul %167, %7, %cst_46 {dimension_numbers = #tpu.dot_dimension_numbers<[1], [0], [0], [1], [0, 0, 1, 1], [], []>} : vector<8x64xf32>, vector<64x256xf32>, vector<8x256xf32> -> vector<8x256xf32>
    %175 = arith.addf %173, %174 : vector<8x256xf32>
    %176 = arith.negf %175 : vector<8x256xf32>
    %177 = math.exp %176 : vector<8x256xf32>
    %cst_47 = arith.constant 1.000000e+00 : f32
    %178 = vector.broadcast %cst_47 : f32 to vector<8x256xf32>
    %179 = arith.addf %178, %177 : vector<8x256xf32>
    %180 = arith.divf %178, %179 : vector<8x256xf32>
    %181 = math.tanh %175 : vector<8x256xf32>
    %182 = vector.extract_strided_slice %180 {offsets = [0, 0], sizes = [8, 64], strides = [1, 1]} : vector<8x256xf32> to vector<8x64xf32>
    %183 = vector.extract_strided_slice %180 {offsets = [0, 64], sizes = [8, 64], strides = [1, 1]} : vector<8x256xf32> to vector<8x64xf32>
    %184 = vector.extract_strided_slice %181 {offsets = [0, 128], sizes = [8, 64], strides = [1, 1]} : vector<8x256xf32> to vector<8x64xf32>
    %185 = vector.extract_strided_slice %180 {offsets = [0, 192], sizes = [8, 64], strides = [1, 1]} : vector<8x256xf32> to vector<8x64xf32>
    %186 = arith.mulf %183, %165 : vector<8x64xf32>
    %187 = arith.mulf %182, %184 : vector<8x64xf32>
    %188 = arith.addf %186, %187 : vector<8x64xf32>
    %189 = math.tanh %188 : vector<8x64xf32>
    %190 = arith.mulf %185, %189 : vector<8x64xf32>
    %191 = arith.index_cast %171 : i32 to index
    %c0_48 = arith.constant 0 : index
    %192 = vector.load %arg4[%191, %c0_48] : memref<64x64xf32, #tpu.memory_space<vmem>>, vector<8x64xf32>
    tpu.vector_store %arg4[%191, %c0_48], %190 {strides = array<i32>} : memref<64x64xf32, #tpu.memory_space<vmem>>, vector<8x64xf32>,
    %c8_i32_49 = arith.constant 8 : i32
    %c0_50 = arith.constant 0 : index
    %c0_51 = arith.constant 0 : index
    %193 = vector.load %arg5[%c0_50, %c0_51] : memref<8x64xf32, #tpu.memory_space<vmem>>, vector<8x64xf32>
    tpu.vector_store %arg5[%c0_50, %c0_51], %188 {strides = array<i32>} : memref<8x64xf32, #tpu.memory_space<vmem>>, vector<8x64xf32>,
    return
  }
}

</mosaic_0001>

<llo_original>
// kernel: tpu_custom_call.1
$region0: #{tpu_custom_call.1}
  #allocation0 [shape = 'u32[]', space=smem, size = 0x4, offset = 0x4, fixed_abs, tag = 'smem constant byte address 0x4 - core index']
  #allocation1 [shape = 'u32[144,128]{1,0:T(1,128)}', space=vmem, size = 0x12000, scoped, tag = 'internal scratch']
  #allocation2 [shape = 'f32[64,256]{1,0:T(8,128)}', space=vmem, size = 0x10000, scoped, tag = 'scratch operand']
  %s0 = inlined_call_operand.vmem [shape: f32[64,32], index: 0, kind: input, shape index: {}]
  %s1 = inlined_call_operand.vmem [shape: f32[32,256], index: 1, kind: input, shape index: {}]
  %s2 = inlined_call_operand.hbm [shape: f32[64,256], index: 2, kind: input, shape index: {}]
  %s3 = inlined_call_operand.vmem [shape: f32[1,256], index: 3, kind: input, shape index: {}]
  %s4 = inlined_call_operand.hbm [shape: f32[64,64], index: 4, kind: output, shape index: {0}]
  %s5 = inlined_call_operand.hbm [shape: f32[8,64], index: 5, kind: output, shape index: {1}]
  %6 = xla_tuple %s4, %s5
  %s7 = sld [smem:[#allocation0]]
  $region38: #{tpu_custom_call.1} parent=0
    _
  %s9 = ssub.s32 1, %s7
  %s10 = scalar_select 0, %s9, %s7
  $region1: #{tpu_custom_call.1} parent=0
    #allocation3 [shape = 'u8[65536]{0}', space=vmem, size = 0x10000, scoped, tag = 'input window, operand 2, single buffered']
    #allocation4 [shape = 's32[1]{0}', space=sflag, size = 0x4, scoped, tag = 'scoped memory for tpu_custom_call.1']
    #allocation5 [shape = 's32[1]{0}', space=sflag, size = 0x4, scoped, tag = 'scoped memory for tpu_custom_call.1']
    #allocation6 [shape = 'u8[32768]{0}', space=vmem, size = 0x8000, scoped, tag = 'output window, operand 0, single buffered']
    #allocation7 [shape = 'u8[4096]{0}', space=vmem, size = 0x1000, scoped, tag = 'output window, operand 1, single buffered']
    #allocation8 [shape = 's32[1]{0}', space=sflag, size = 0x4, scoped, tag = 'scoped memory for tpu_custom_call.1']
    %11 = vsyncpa [#allocation4], 0
    %12 = vsyncpa [#allocation5], 0
    %13 = vsyncpa [#allocation8], 0
    // Predicated region
    $region2: #{tpu_custom_call.1} parent=1 // pred_check
      _
    $region3: #{tpu_custom_call.1} parent=1 // pred_check_branch
      %15 = sbr.rel (0) target = $region5
    $region4: #{tpu_custom_call.1} parent=1 // pred_region
      _
    $region5: #{tpu_custom_call.1} parent=1 // pred_fallthru
      _
    // Predicated region
    $region6: #{tpu_custom_call.1} parent=1 // pred_check
      _
    $region7: #{tpu_custom_call.1} parent=1 // pred_check_branch
      %17 = sbr.rel (0) target = $region9
    $region8: #{tpu_custom_call.1} parent=1 // pred_region
      _
    $region9: #{tpu_custom_call.1} parent=1 // pred_fallthru
      _
    // Predicated region
    $region10: #{tpu_custom_call.1} parent=1 // pred_check
      _
    $region11: #{tpu_custom_call.1} parent=1 // pred_check_branch
      %19 = sbr.rel (0) target = $region13
    $region12: #{tpu_custom_call.1} parent=1 // pred_region
      %s21 = ssub.s32 2048, 2048
      %22 = vsyncadd [#allocation4], %s21
      %s23 = sshll.u32 [#allocation3], 4
      %s24 = int_to_ptr.vmem [resolvable:$true] %s23
      %29 = dma.hbm_to_vmem [thread:$0]  %s2, 2048, %s24, [#allocation4], 256, 256, 16
    $region13: #{tpu_custom_call.1} parent=1 // pred_fallthru
      _
    // Predicated region
    $region14: #{tpu_custom_call.1} parent=1 // pred_check
      _
    $region15: #{tpu_custom_call.1} parent=1 // pred_check_branch
      %31 = sbr.rel (0) target = $region17
    $region16: #{tpu_custom_call.1} parent=1 // pred_region
      _
    $region17: #{tpu_custom_call.1} parent=1 // pred_fallthru
      _
    // Predicated region
    $region18: #{tpu_custom_call.1} parent=1 // pred_check
      _
    $region19: #{tpu_custom_call.1} parent=1 // pred_check_branch
      %33 = sbr.rel (0) target = $region21
    $region20: #{tpu_custom_call.1} parent=1 // pred_region
      %34 = dma.done [#allocation4], 2048
    $region21: #{tpu_custom_call.1} parent=1 // pred_fallthru
      _
    %v35 = vld [vmem:[%s0] sm:$0xff]
    %v36 = vld [vmem:[%s0 + $0x8] sm:$0xff]
    %v37 = vld [vmem:[%s0 + $0x10] sm:$0xff]
    %v38 = vld [vmem:[%s0 + $0x18] sm:$0xff]
    %v39 = vld [vmem:[%s0 + $0x20] sm:$0xff]
    %v40 = vld [vmem:[%s0 + $0x28] sm:$0xff]
    %v41 = vld [vmem:[%s0 + $0x30] sm:$0xff]
    %v42 = vld [vmem:[%s0 + $0x38] sm:$0xff]
    %v43 = vld [vmem:[%s1] sm:$0xff]
    %v44 = vld [vmem:[%s1 + $0x8] sm:$0xff]
    %v45 = vld [vmem:[%s1 + $0x10] sm:$0xff]
    %v46 = vld [vmem:[%s1 + $0x18] sm:$0xff]
    %v47 = vld [vmem:[%s1 + $0x20] sm:$0xff]
    %v48 = vld [vmem:[%s1 + $0x28] sm:$0xff]
    %v49 = vld [vmem:[%s1 + $0x30] sm:$0xff]
    %v50 = vld [vmem:[%s1 + $0x38] sm:$0xff]
    %v51 = vld [vmem:[%s3] sm:$0x3]
    %v53 = vlaneseq
    %v54 = vshrl.u32 %v53, 7
    %v55 = vsub.s32 0, %v54
    %v56 = vrot.slane %v51, %v55
    %v57 = vlaneseq
    %v58 = vshrl.u32 %v57, 7
    %v59 = vsub.s32 1, %v58
    %v60 = vrot.slane %v51, %v59
    %vm63 = vcmask 261120
    %v65 = vsel %vm63, %v35, 0
    %v68 = vsel %vm63, %v36, 0
    %v71 = vsel %vm63, %v37, 0
    %v74 = vsel %vm63, %v38, 0
    %v77 = vsel %vm63, %v39, 0
    %v80 = vsel %vm63, %v40, 0
    %v83 = vsel %vm63, %v41, 0
    %v86 = vsel %vm63, %v42, 0
    %88 = vmatprep.subr.mxu0 %v44
    %89 = vmatpush1.msra.mxu0 %v43
    %90 = vmatprep.subr.mxu0 %v46
    %91 = vmatpush1.msra.mxu0 %v45
    %92 = vmatprep.subr.mxu0 %v48
    %93 = vmatpush1.msra.mxu0 %v47
    %94 = vmatprep.subr.mxu0 %v50
    %95 = vmatpush1.msra.mxu0 %v49
    %96 = vmatprep.subr.mxu0 0.0
    %97 = vmatpush1.msra.mxu0 0.0
    %98 = vmatprep.subr.mxu0 0.0
    %99 = vmatpush1.msra.mxu0 0.0
    %100 = vmatprep.subr.mxu0 0.0
    %101 = vmatpush1.msra.mxu0 0.0
    %102 = vmatprep.subr.mxu0 0.0
    %103 = vmatpush1.msra.mxu0 0.0
    %104 = vmatprep.subr.mxu0 0.0
    %105 = vmatpush1.msra.mxu0 0.0
    %106 = vmatprep.subr.mxu0 0.0
    %107 = vmatpush1.msra.mxu0 0.0
    %108 = vmatprep.subr.mxu0 0.0
    %109 = vmatpush1.msra.mxu0 0.0
    %110 = vmatprep.subr.mxu0 0.0
    %111 = vmatpush1.msra.mxu0 0.0
    %112 = vmatprep.subr.mxu0 0.0
    %113 = vmatpush1.msra.mxu0 0.0
    %114 = vmatprep.subr.mxu0 0.0
    %115 = vmatpush1.msra.mxu0 0.0
    %116 = vmatprep.subr.mxu0 0.0
    %117 = vmatpush1.msra.mxu0 0.0
    %118 = vmatprep.subr.mxu0 0.0
    %119 = vmatpush1.msra.mxu0 0.0
    %120 = vmatprep.subr.mxu0 0.0
    %121 = vmatpush1.msra.mxu0 0.0
    %122 = vmatprep.subr.mxu0 0.0
    %123 = vmatpush1.msra.mxu0 0.0
    %124 = vmatprep.subr.mxu0 0.0
    %125 = vmatpush1.msra.mxu0 0.0
    %126 = vmatprep.subr.mxu0 0.0
    %127 = vmatpush1.msra.mxu0 0.0
    %128 = vmatprep.subr.mxu0 0.0
    %129 = vmatpush1.msra.mxu0 0.0
    %130 = vmatprep.subr.mxu0 0.0
    %131 = vmatpush1.msra.mxu0 0.0
    %132 = vmatprep.subr.mxu0 0.0
    %133 = vmatpush1.msra.mxu0 0.0
    %134 = vmatprep.subr.mxu0 0.0
    %135 = vmatpush1.msra.mxu0 0.0
    %136 = vmatprep.subr.mxu0 0.0
    %137 = vmatpush1.msra.mxu0 0.0
    %138 = vmatprep.subr.mxu0 0.0
    %139 = vmatpush1.msra.mxu0 0.0
    %140 = vmatprep.subr.mxu0 0.0
    %141 = vmatpush1.msra.mxu0 0.0
    %142 = vmatprep.subr.mxu0 0.0
    %143 = vmatpush1.msra.mxu0 0.0
    %144 = vmatprep.subr.mxu0 0.0
    %145 = vmatpush1.msra.mxu0 0.0
    %146 = vmatprep.subr.mxu0 0.0
    %147 = vmatpush1.msra.mxu0 0.0
    %148 = vmatprep.subr.mxu0 0.0
    %149 = vmatpush1.msra.mxu0 0.0
    %150 = vmatprep.subr.mxu0 0.0
    %151 = vmatpush1.msra.mxu0 0.0
    %152 = vmatprep.mubr.f32.mxu0 0.0
    %153 = vmatmul.mubr.f32.gmra.mrb[0].mxu0 %v65
    %v154 = vpop.f32.mrb[0].mxu0
    %v155 = vadd.f32 %v56, %v154
    %v156 = vpop.f32.mrb[0].mxu0
    %v157 = vadd.f32 %v60, %v156
    %158 = vmatprep.mubr.f32.mxu0 0.0
    %159 = vmatmul.mubr.f32.gmra.mrb[0].mxu0 %v68
    %v160 = vpop.f32.mrb[0].mxu0
    %v161 = vadd.f32 %v56, %v160
    %v162 = vpop.f32.mrb[0].mxu0
    %v163 = vadd.f32 %v60, %v162
    %164 = vmatprep.mubr.f32.mxu0 0.0
    %165 = vmatmul.mubr.f32.gmra.mrb[0].mxu0 %v71
    %v166 = vpop.f32.mrb[0].mxu0
    %v167 = vadd.f32 %v56, %v166
    %v168 = vpop.f32.mrb[0].mxu0
    %v169 = vadd.f32 %v60, %v168
    %170 = vmatprep.mubr.f32.mxu0 0.0
    %171 = vmatmul.mubr.f32.gmra.mrb[0].mxu0 %v74
    %v172 = vpop.f32.mrb[0].mxu0
    %v173 = vadd.f32 %v56, %v172
    %v174 = vpop.f32.mrb[0].mxu0
    %v175 = vadd.f32 %v60, %v174
    %176 = vmatprep.mubr.f32.mxu0 0.0
    %177 = vmatmul.mubr.f32.gmra.mrb[0].mxu0 %v77
    %v178 = vpop.f32.mrb[0].mxu0
    %v179 = vadd.f32 %v56, %v178
    %v180 = vpop.f32.mrb[0].mxu0
    %v181 = vadd.f32 %v60, %v180
    %182 = vmatprep.mubr.f32.mxu0 0.0
    %183 = vmatmul.mubr.f32.gmra.mrb[0].mxu0 %v80
    %v184 = vpop.f32.mrb[0].mxu0
    %v185 = vadd.f32 %v56, %v184
    %v186 = vpop.f32.mrb[0].mxu0
    %v187 = vadd.f32 %v60, %v186
    %188 = vmatprep.mubr.f32.mxu0 0.0
    %189 = vmatmul.mubr.f32.gmra.mrb[0].mxu0 %v83
    %v190 = vpop.f32.mrb[0].mxu0
    %v191 = vadd.f32 %v56, %v190
    %v192 = vpop.f32.mrb[0].mxu0
    %v193 = vadd.f32 %v60, %v192
    %194 = vmatprep.mubr.f32.mxu0 0.0
    %195 = vmatmul.mubr.f32.gmra.mrb[0].mxu0 %v86
    %v196 = vpop.f32.mrb[0].mxu0
    %v197 = vadd.f32 %v56, %v196
    %v198 = vpop.f32.mrb[0].mxu0
    %v199 = vadd.f32 %v60, %v198
    %200 = vdwg.mxu0
    %201 = vst [vmem:[#allocation2] sm:$0xff] %v155
    %202 = vst [vmem:[#allocation2 + $0x8] sm:$0xff] %v157
    %203 = vst [vmem:[#allocation2 + $0x10] sm:$0xff] %v161
    %204 = vst [vmem:[#allocation2 + $0x18] sm:$0xff] %v163
    %205 = vst [vmem:[#allocation2 + $0x20] sm:$0xff] %v167
    %206 = vst [vmem:[#allocation2 + $0x28] sm:$0xff] %v169
    %207 = vst [vmem:[#allocation2 + $0x30] sm:$0xff] %v173
    %208 = vst [vmem:[#allocation2 + $0x38] sm:$0xff] %v175
    %209 = vst [vmem:[#allocation2 + $0x40] sm:$0xff] %v179
    %210 = vst [vmem:[#allocation2 + $0x48] sm:$0xff] %v181
    %211 = vst [vmem:[#allocation2 + $0x50] sm:$0xff] %v185
    %212 = vst [vmem:[#allocation2 + $0x58] sm:$0xff] %v187
    %213 = vst [vmem:[#allocation2 + $0x60] sm:$0xff] %v191
    %214 = vst [vmem:[#allocation2 + $0x68] sm:$0xff] %v193
    %215 = vst [vmem:[#allocation2 + $0x70] sm:$0xff] %v197
    %216 = vst [vmem:[#allocation2 + $0x78] sm:$0xff] %v199
    %v217 = vld [vmem:[#allocation3] sm:$0xff]
    %v218 = vld [vmem:[#allocation3 + $0x8] sm:$0xff]
    %v219 = vld [vmem:[#allocation3 + $0x10] sm:$0xff]
    %v220 = vld [vmem:[#allocation3 + $0x18] sm:$0xff]
    %v221 = vld [vmem:[#allocation3 + $0x20] sm:$0xff]
    %v222 = vld [vmem:[#allocation3 + $0x28] sm:$0xff]
    %v223 = vld [vmem:[#allocation3 + $0x30] sm:$0xff]
    %v224 = vld [vmem:[#allocation3 + $0x38] sm:$0xff]
    %v225 = vld [vmem:[#allocation3 + $0x40] sm:$0xff]
    %v226 = vld [vmem:[#allocation3 + $0x48] sm:$0xff]
    %v227 = vld [vmem:[#allocation3 + $0x50] sm:$0xff]
    %v228 = vld [vmem:[#allocation3 + $0x58] sm:$0xff]
    %v229 = vld [vmem:[#allocation3 + $0x60] sm:$0xff]
    %v230 = vld [vmem:[#allocation3 + $0x68] sm:$0xff]
    %v231 = vld [vmem:[#allocation3 + $0x70] sm:$0xff]
    %v232 = vld [vmem:[#allocation3 + $0x78] sm:$0xff]
    %s233 = smul.u32 0, 2
    %s234 = smul.addr %s233, 8
    %s235 = scalar_lea.vmem [#allocation2], %s234
    %v236 = vld [vmem:[%s235] sm:$0xff]
    %v237 = vld [vmem:[%s235 + $0x8] sm:$0xff]
    %vm238 = vcmask 523264
    %v240 = vsel %vm238, 0.0, 0
    %242 = vmatprep.subr.mxu0 %v218
    %243 = vmatpush1.msra.mxu0 %v217
    %244 = vmatprep.subr.mxu0 %v220
    %245 = vmatpush1.msra.mxu0 %v219
    %246 = vmatprep.subr.mxu0 %v222
    %247 = vmatpush1.msra.mxu0 %v221
    %248 = vmatprep.subr.mxu0 %v224
    %249 = vmatpush1.msra.mxu0 %v223
    %250 = vmatprep.subr.mxu0 %v226
    %251 = vmatpush1.msra.mxu0 %v225
    %252 = vmatprep.subr.mxu0 %v228
    %253 = vmatpush1.msra.mxu0 %v227
    %254 = vmatprep.subr.mxu0 %v230
    %255 = vmatpush1.msra.mxu0 %v229
    %256 = vmatprep.subr.mxu0 %v232
    %257 = vmatpush1.msra.mxu0 %v231
    %258 = vmatprep.subr.mxu0 0.0
    %259 = vmatpush1.msra.mxu0 0.0
    %260 = vmatprep.subr.mxu0 0.0
    %261 = vmatpush1.msra.mxu0 0.0
    %262 = vmatprep.subr.mxu0 0.0
    %263 = vmatpush1.msra.mxu0 0.0
    %264 = vmatprep.subr.mxu0 0.0
    %265 = vmatpush1.msra.mxu0 0.0
    %266 = vmatprep.subr.mxu0 0.0
    %267 = vmatpush1.msra.mxu0 0.0
    %268 = vmatprep.subr.mxu0 0.0
    %269 = vmatpush1.msra.mxu0 0.0
    %270 = vmatprep.subr.mxu0 0.0
    %271 = vmatpush1.msra.mxu0 0.0
    %272 = vmatprep.subr.mxu0 0.0
    %273 = vmatpush1.msra.mxu0 0.0
    %274 = vmatprep.subr.mxu0 0.0
    %275 = vmatpush1.msra.mxu0 0.0
    %276 = vmatprep.subr.mxu0 0.0
    %277 = vmatpush1.msra.mxu0 0.0
    %278 = vmatprep.subr.mxu0 0.0
    %279 = vmatpush1.msra.mxu0 0.0
    %280 = vmatprep.subr.mxu0 0.0
    %281 = vmatpush1.msra.mxu0 0.0
    %282 = vmatprep.subr.mxu0 0.0
    %283 = vmatpush1.msra.mxu0 0.0
    %284 = vmatprep.subr.mxu0 0.0
    %285 = vmatpush1.msra.mxu0 0.0
    %286 = vmatprep.subr.mxu0 0.0
    %287 = vmatpush1.msra.mxu0 0.0
    %288 = vmatprep.subr.mxu0 0.0
    %289 = vmatpush1.msra.mxu0 0.0
    %290 = vmatprep.subr.mxu0 0.0
    %291 = vmatpush1.msra.mxu0 0.0
    %292 = vmatprep.subr.mxu0 0.0
    %293 = vmatpush1.msra.mxu0 0.0
    %294 = vmatprep.subr.mxu0 0.0
    %295 = vmatpush1.msra.mxu0 0.0
    %296 = vmatprep.subr.mxu0 0.0
    %297 = vmatpush1.msra.mxu0 0.0
    %298 = vmatprep.subr.mxu0 0.0
    %299 = vmatpush1.msra.mxu0 0.0
    %300 = vmatprep.subr.mxu0 0.0
    %301 = vmatpush1.msra.mxu0 0.0
    %302 = vmatprep.subr.mxu0 0.0
    %303 = vmatpush1.msra.mxu0 0.0
    %304 = vmatprep.subr.mxu0 0.0
    %305 = vmatpush1.msra.mxu0 0.0
    %306 = vmatprep.mubr.f32.mxu0 0.0
    %307 = vmatmul.mubr.f32.gmra.mrb[0].mxu0 %v240
    %v308 = vpop.f32.mrb[0].mxu0
    %v309 = vadd.f32 0.0, %v308
    %v310 = vpop.f32.mrb[0].mxu0
    %v311 = vadd.f32 0.0, %v310
    %312 = vdwg.mxu0
    %v313 = vadd.f32 %v236, %v309
    %v314 = vadd.f32 %v237, %v311
    %v315 = vxor.u32 %v313, 2147483648
    %v316 = vxor.u32 %v314, 2147483648
    %v317 = vmul.f32 %v315, 1.442695
    %v318 = vpow.pop %v317
    %v319 = vmul.f32 %v316, 1.442695
    %v320 = vpow.pop %v319
    %v321 = vadd.f32 %v318, 1.0
    %v322 = vadd.f32 %v320, 1.0
    %v323 = vrcp.pop %v321
    %v324 = vmul.f32 1.0, %v323
    %v325 = vrcp.pop %v322
    %v326 = vmul.f32 1.0, %v325
    %v327 = vtanh.pop %v314
    %v328 = vmul.f32 %v324, 0.0
    %v329 = vmul.f32 %v324, %v327
    %331 = vrot.lane.b32.xlu0 %v329, 64
    %v332 = vpop.permute.xlu0 %331
    %v334 = vadd.f32 %v328, %v332
    %v335 = vtanh.pop %v334
    %v336 = vmul.f32 %v326, %v335
    %338 = vrot.lane.b32.xlu0 %v336, 64
    %v339 = vpop.permute.xlu0 %338
    %341 = vst.msk [vmem:[#allocation6] sm:$0xff] %vm238, %v339
    %s342 = smul.u32 1, 2
    %s343 = smul.addr %s342, 8
    %s344 = scalar_lea.vmem [#allocation2], %s343
    %v345 = vld [vmem:[%s344] sm:$0xff]
    %v346 = vld [vmem:[%s344 + $0x8] sm:$0xff]
    %v347 = vsel %vm238, %v339, 0
    %349 = vmatprep.subr.mxu0 %v218
    %350 = vmatpush1.msra.mxu0 %v217
    %351 = vmatprep.subr.mxu0 %v220
    %352 = vmatpush1.msra.mxu0 %v219
    %353 = vmatprep.subr.mxu0 %v222
    %354 = vmatpush1.msra.mxu0 %v221
    %355 = vmatprep.subr.mxu0 %v224
    %356 = vmatpush1.msra.mxu0 %v223
    %357 = vmatprep.subr.mxu0 %v226
    %358 = vmatpush1.msra.mxu0 %v225
    %359 = vmatprep.subr.mxu0 %v228
    %360 = vmatpush1.msra.mxu0 %v227
    %361 = vmatprep.subr.mxu0 %v230
    %362 = vmatpush1.msra.mxu0 %v229
    %363 = vmatprep.subr.mxu0 %v232
    %364 = vmatpush1.msra.mxu0 %v231
    %365 = vmatprep.subr.mxu0 0.0
    %366 = vmatpush1.msra.mxu0 0.0
    %367 = vmatprep.subr.mxu0 0.0
    %368 = vmatpush1.msra.mxu0 0.0
    %369 = vmatprep.subr.mxu0 0.0
    %370 = vmatpush1.msra.mxu0 0.0
    %371 = vmatprep.subr.mxu0 0.0
    %372 = vmatpush1.msra.mxu0 0.0
    %373 = vmatprep.subr.mxu0 0.0
    %374 = vmatpush1.msra.mxu0 0.0
    %375 = vmatprep.subr.mxu0 0.0
    %376 = vmatpush1.msra.mxu0 0.0
    %377 = vmatprep.subr.mxu0 0.0
    %378 = vmatpush1.msra.mxu0 0.0
    %379 = vmatprep.subr.mxu0 0.0
    %380 = vmatpush1.msra.mxu0 0.0
    %381 = vmatprep.subr.mxu0 0.0
    %382 = vmatpush1.msra.mxu0 0.0
    %383 = vmatprep.subr.mxu0 0.0
    %384 = vmatpush1.msra.mxu0 0.0
    %385 = vmatprep.subr.mxu0 0.0
    %386 = vmatpush1.msra.mxu0 0.0
    %387 = vmatprep.subr.mxu0 0.0
    %388 = vmatpush1.msra.mxu0 0.0
    %389 = vmatprep.subr.mxu0 0.0
    %390 = vmatpush1.msra.mxu0 0.0
    %391 = vmatprep.subr.mxu0 0.0
    %392 = vmatpush1.msra.mxu0 0.0
    %393 = vmatprep.subr.mxu0 0.0
    %394 = vmatpush1.msra.mxu0 0.0
    %395 = vmatprep.subr.mxu0 0.0
    %396 = vmatpush1.msra.mxu0 0.0
    %397 = vmatprep.subr.mxu0 0.0
    %398 = vmatpush1.msra.mxu0 0.0
    %399 = vmatprep.subr.mxu0 0.0
    %400 = vmatpush1.msra.mxu0 0.0
    %401 = vmatprep.subr.mxu0 0.0
    %402 = vmatpush1.msra.mxu0 0.0
    %403 = vmatprep.subr.mxu0 0.0
    %404 = vmatpush1.msra.mxu0 0.0
    %405 = vmatprep.subr.mxu0 0.0
    %406 = vmatpush1.msra.mxu0 0.0
    %407 = vmatprep.subr.mxu0 0.0
    %408 = vmatpush1.msra.mxu0 0.0
    %409 = vmatprep.subr.mxu0 0.0
    %410 = vmatpush1.msra.mxu0 0.0
    %411 = vmatprep.subr.mxu0 0.0
    %412 = vmatpush1.msra.mxu0 0.0
    %413 = vmatprep.mubr.f32.mxu0 0.0
    %414 = vmatmul.mubr.f32.gmra.mrb[0].mxu0 %v347
    %v415 = vpop.f32.mrb[0].mxu0
    %v416 = vadd.f32 0.0, %v415
    %v417 = vpop.f32.mrb[0].mxu0
    %v418 = vadd.f32 0.0, %v417
    %419 = vdwg.mxu0
    %v420 = vadd.f32 %v345, %v416
    %v421 = vadd.f32 %v346, %v418
    %v422 = vxor.u32 %v420, 2147483648
    %v423 = vxor.u32 %v421, 2147483648
    %v424 = vmul.f32 %v422, 1.442695
    %v425 = vpow.pop %v424
    %v426 = vmul.f32 %v423, 1.442695
    %v427 = vpow.pop %v426
    %v428 = vadd.f32 %v425, 1.0
    %v429 = vadd.f32 %v427, 1.0
    %v430 = vrcp.pop %v428
    %v431 = vmul.f32 1.0, %v430
    %v432 = vrcp.pop %v429
    %v433 = vmul.f32 1.0, %v432
    %v434 = vtanh.pop %v421
    %v435 = vmul.f32 %v431, %v334
    %v436 = vmul.f32 %v431, %v434
    %438 = vrot.lane.b32.xlu0 %v436, 64
    %v439 = vpop.permute.xlu0 %438
    %v441 = vadd.f32 %v435, %v439
    %v442 = vtanh.pop %v441
    %v443 = vmul.f32 %v433, %v442
    %445 = vrot.lane.b32.xlu0 %v443, 64
    %v446 = vpop.permute.xlu0 %445
    %s448 = scalar_lea.vmem [#allocation6], 8
    %449 = vst.msk [vmem:[%s448] sm:$0xff] %vm238, %v446
    %s450 = smul.u32 2, 2
    %s451 = smul.addr %s450, 8
    %s452 = scalar_lea.vmem [#allocation2], %s451
    %v453 = vld [vmem:[%s452] sm:$0xff]
    %v454 = vld [vmem:[%s452 + $0x8] sm:$0xff]
    %v455 = vsel %vm238, %v446, 0
    %457 = vmatprep.subr.mxu0 %v218
    %458 = vmatpush1.msra.mxu0 %v217
    %459 = vmatprep.subr.mxu0 %v220
    %460 = vmatpush1.msra.mxu0 %v219
    %461 = vmatprep.subr.mxu0 %v222
    %462 = vmatpush1.msra.mxu0 %v221
    %463 = vmatprep.subr.mxu0 %v224
    %464 = vmatpush1.msra.mxu0 %v223
    %465 = vmatprep.subr.mxu0 %v226
    %466 = vmatpush1.msra.mxu0 %v225
    %467 = vmatprep.subr.mxu0 %v228
    %468 = vmatpush1.msra.mxu0 %v227
    %469 = vmatprep.subr.mxu0 %v230
    %470 = vmatpush1.msra.mxu0 %v229
    %471 = vmatprep.subr.mxu0 %v232
    %472 = vmatpush1.msra.mxu0 %v231
    %473 = vmatprep.subr.mxu0 0.0
    %474 = vmatpush1.msra.mxu0 0.0
    %475 = vmatprep.subr.mxu0 0.0
    %476 = vmatpush1.msra.mxu0 0.0
    %477 = vmatprep.subr.mxu0 0.0
    %478 = vmatpush1.msra.mxu0 0.0
    %479 = vmatprep.subr.mxu0 0.0
    %480 = vmatpush1.msra.mxu0 0.0
    %481 = vmatprep.subr.mxu0 0.0
    %482 = vmatpush1.msra.mxu0 0.0
    %483 = vmatprep.subr.mxu0 0.0
    %484 = vmatpush1.msra.mxu0 0.0
    %485 = vmatprep.subr.mxu0 0.0
    %486 = vmatpush1.msra.mxu0 0.0
    %487 = vmatprep.subr.mxu0 0.0
    %488 = vmatpush1.msra.mxu0 0.0
    %489 = vmatprep.subr.mxu0 0.0
    %490 = vmatpush1.msra.mxu0 0.0
    %491 = vmatprep.subr.mxu0 0.0
    %492 = vmatpush1.msra.mxu0 0.0
    %493 = vmatprep.subr.mxu0 0.0
    %494 = vmatpush1.msra.mxu0 0.0
    %495 = vmatprep.subr.mxu0 0.0
    %496 = vmatpush1.msra.mxu0 0.0
    %497 = vmatprep.subr.mxu0 0.0
    %498 = vmatpush1.msra.mxu0 0.0
    %499 = vmatprep.subr.mxu0 0.0
    %500 = vmatpush1.msra.mxu0 0.0
    %501 = vmatprep.subr.mxu0 0.0
    %502 = vmatpush1.msra.mxu0 0.0
    %503 = vmatprep.subr.mxu0 0.0
    %504 = vmatpush1.msra.mxu0 0.0
    %505 = vmatprep.subr.mxu0 0.0
    %506 = vmatpush1.msra.mxu0 0.0
    %507 = vmatprep.subr.mxu0 0.0
    %508 = vmatpush1.msra.mxu0 0.0
    %509 = vmatprep.subr.mxu0 0.0
    %510 = vmatpush1.msra.mxu0 0.0
    %511 = vmatprep.subr.mxu0 0.0
    %512 = vmatpush1.msra.mxu0 0.0
    %513 = vmatprep.subr.mxu0 0.0
    %514 = vmatpush1.msra.mxu0 0.0
    %515 = vmatprep.subr.mxu0 0.0
    %516 = vmatpush1.msra.mxu0 0.0
    %517 = vmatprep.subr.mxu0 0.0
    %518 = vmatpush1.msra.mxu0 0.0
    %519 = vmatprep.subr.mxu0 0.0
    %520 = vmatpush1.msra.mxu0 0.0
    %521 = vmatprep.mubr.f32.mxu0 0.0
    %522 = vmatmul.mubr.f32.gmra.mrb[0].mxu0 %v455
    %v523 = vpop.f32.mrb[0].mxu0
    %v524 = vadd.f32 0.0, %v523
    %v525 = vpop.f32.mrb[0].mxu0
    %v526 = vadd.f32 0.0, %v525
    %527 = vdwg.mxu0
    %v528 = vadd.f32 %v453, %v524
    %v529 = vadd.f32 %v454, %v526
    %v530 = vxor.u32 %v528, 2147483648
    %v531 = vxor.u32 %v529, 2147483648
    %v532 = vmul.f32 %v530, 1.442695
    %v533 = vpow.pop %v532
    %v534 = vmul.f32 %v531, 1.442695
    %v535 = vpow.pop %v534
    %v536 = vadd.f32 %v533, 1.0
    %v537 = vadd.f32 %v535, 1.0
    %v538 = vrcp.pop %v536
    %v539 = vmul.f32 1.0, %v538
    %v540 = vrcp.pop %v537
    %v541 = vmul.f32 1.0, %v540
    %v542 = vtanh.pop %v529
    %v543 = vmul.f32 %v539, %v441
    %v544 = vmul.f32 %v539, %v542
    %546 = vrot.lane.b32.xlu0 %v544, 64
    %v547 = vpop.permute.xlu0 %546
    %v549 = vadd.f32 %v543, %v547
    %v550 = vtanh.pop %v549
    %v551 = vmul.f32 %v541, %v550
    %553 = vrot.lane.b32.xlu0 %v551, 64
    %v554 = vpop.permute.xlu0 %553
    %s556 = scalar_lea.vmem [#allocation6], 16
    %557 = vst.msk [vmem:[%s556] sm:$0xff] %vm238, %v554
    %s558 = smul.u32 3, 2
    %s559 = smul.addr %s558, 8
    %s560 = scalar_lea.vmem [#allocation2], %s559
    %v561 = vld [vmem:[%s560] sm:$0xff]
    %v562 = vld [vmem:[%s560 + $0x8] sm:$0xff]
    %v563 = vsel %vm238, %v554, 0
    %565 = vmatprep.subr.mxu0 %v218
    %566 = vmatpush1.msra.mxu0 %v217
    %567 = vmatprep.subr.mxu0 %v220
    %568 = vmatpush1.msra.mxu0 %v219
    %569 = vmatprep.subr.mxu0 %v222
    %570 = vmatpush1.msra.mxu0 %v221
    %571 = vmatprep.subr.mxu0 %v224
    %572 = vmatpush1.msra.mxu0 %v223
    %573 = vmatprep.subr.mxu0 %v226
    %574 = vmatpush1.msra.mxu0 %v225
    %575 = vmatprep.subr.mxu0 %v228
    %576 = vmatpush1.msra.mxu0 %v227
    %577 = vmatprep.subr.mxu0 %v230
    %578 = vmatpush1.msra.mxu0 %v229
    %579 = vmatprep.subr.mxu0 %v232
    %580 = vmatpush1.msra.mxu0 %v231
    %581 = vmatprep.subr.mxu0 0.0
    %582 = vmatpush1.msra.mxu0 0.0
    %583 = vmatprep.subr.mxu0 0.0
    %584 = vmatpush1.msra.mxu0 0.0
    %585 = vmatprep.subr.mxu0 0.0
    %586 = vmatpush1.msra.mxu0 0.0
    %587 = vmatprep.subr.mxu0 0.0
    %588 = vmatpush1.msra.mxu0 0.0
    %589 = vmatprep.subr.mxu0 0.0
    %590 = vmatpush1.msra.mxu0 0.0
    %591 = vmatprep.subr.mxu0 0.0
    %592 = vmatpush1.msra.mxu0 0.0
    %593 = vmatprep.subr.mxu0 0.0
    %594 = vmatpush1.msra.mxu0 0.0
    %595 = vmatprep.subr.mxu0 0.0
    %596 = vmatpush1.msra.mxu0 0.0
    %597 = vmatprep.subr.mxu0 0.0
    %598 = vmatpush1.msra.mxu0 0.0
    %599 = vmatprep.subr.mxu0 0.0
    %600 = vmatpush1.msra.mxu0 0.0
    %601 = vmatprep.subr.mxu0 0.0
    %602 = vmatpush1.msra.mxu0 0.0
    %603 = vmatprep.subr.mxu0 0.0
    %604 = vmatpush1.msra.mxu0 0.0
    %605 = vmatprep.subr.mxu0 0.0
    %606 = vmatpush1.msra.mxu0 0.0
    %607 = vmatprep.subr.mxu0 0.0
    %608 = vmatpush1.msra.mxu0 0.0
    %609 = vmatprep.subr.mxu0 0.0
    %610 = vmatpush1.msra.mxu0 0.0
    %611 = vmatprep.subr.mxu0 0.0
    %612 = vmatpush1.msra.mxu0 0.0
    %613 = vmatprep.subr.mxu0 0.0
    %614 = vmatpush1.msra.mxu0 0.0
    %615 = vmatprep.subr.mxu0 0.0
    %616 = vmatpush1.msra.mxu0 0.0
    %617 = vmatprep.subr.mxu0 0.0
    %618 = vmatpush1.msra.mxu0 0.0
    %619 = vmatprep.subr.mxu0 0.0
    %620 = vmatpush1.msra.mxu0 0.0
    %621 = vmatprep.subr.mxu0 0.0
    %622 = vmatpush1.msra.mxu0 0.0
    %623 = vmatprep.subr.mxu0 0.0
    %624 = vmatpush1.msra.mxu0 0.0
    %625 = vmatprep.subr.mxu0 0.0
    %626 = vmatpush1.msra.mxu0 0.0
    %627 = vmatprep.subr.mxu0 0.0
    %628 = vmatpush1.msra.mxu0 0.0
    %629 = vmatprep.mubr.f32.mxu0 0.0
    %630 = vmatmul.mubr.f32.gmra.mrb[0].mxu0 %v563
    %v631 = vpop.f32.mrb[0].mxu0
    %v632 = vadd.f32 0.0, %v631
    %v633 = vpop.f32.mrb[0].mxu0
    %v634 = vadd.f32 0.0, %v633
    %635 = vdwg.mxu0
    %v636 = vadd.f32 %v561, %v632
    %v637 = vadd.f32 %v562, %v634
    %v638 = vxor.u32 %v636, 2147483648
    %v639 = vxor.u32 %v637, 2147483648
    %v640 = vmul.f32 %v638, 1.442695
    %v641 = vpow.pop %v640
    %v642 = vmul.f32 %v639, 1.442695
    %v643 = vpow.pop %v642
    %v644 = vadd.f32 %v641, 1.0
    %v645 = vadd.f32 %v643, 1.0
    %v646 = vrcp.pop %v644
    %v647 = vmul.f32 1.0, %v646
    %v648 = vrcp.pop %v645
    %v649 = vmul.f32 1.0, %v648
    %v650 = vtanh.pop %v637
    %v651 = vmul.f32 %v647, %v549
    %v652 = vmul.f32 %v647, %v650
    %654 = vrot.lane.b32.xlu0 %v652, 64
    %v655 = vpop.permute.xlu0 %654
    %v657 = vadd.f32 %v651, %v655
    %v658 = vtanh.pop %v657
    %v659 = vmul.f32 %v649, %v658
    %661 = vrot.lane.b32.xlu0 %v659, 64
    %v662 = vpop.permute.xlu0 %661
    %s664 = scalar_lea.vmem [#allocation6], 24
    %665 = vst.msk [vmem:[%s664] sm:$0xff] %vm238, %v662
    %s666 = smul.u32 4, 2
    %s667 = smul.addr %s666, 8
    %s668 = scalar_lea.vmem [#allocation2], %s667
    %v669 = vld [vmem:[%s668] sm:$0xff]
    %v670 = vld [vmem:[%s668 + $0x8] sm:$0xff]
    %v671 = vsel %vm238, %v662, 0
    %673 = vmatprep.subr.mxu0 %v218
    %674 = vmatpush1.msra.mxu0 %v217
    %675 = vmatprep.subr.mxu0 %v220
    %676 = vmatpush1.msra.mxu0 %v219
    %677 = vmatprep.subr.mxu0 %v222
    %678 = vmatpush1.msra.mxu0 %v221
    %679 = vmatprep.subr.mxu0 %v224
    %680 = vmatpush1.msra.mxu0 %v223
    %681 = vmatprep.subr.mxu0 %v226
    %682 = vmatpush1.msra.mxu0 %v225
    %683 = vmatprep.subr.mxu0 %v228
    %684 = vmatpush1.msra.mxu0 %v227
    %685 = vmatprep.subr.mxu0 %v230
    %686 = vmatpush1.msra.mxu0 %v229
    %687 = vmatprep.subr.mxu0 %v232
    %688 = vmatpush1.msra.mxu0 %v231
    %689 = vmatprep.subr.mxu0 0.0
    %690 = vmatpush1.msra.mxu0 0.0
    %691 = vmatprep.subr.mxu0 0.0
    %692 = vmatpush1.msra.mxu0 0.0
    %693 = vmatprep.subr.mxu0 0.0
    %694 = vmatpush1.msra.mxu0 0.0
    %695 = vmatprep.subr.mxu0 0.0
    %696 = vmatpush1.msra.mxu0 0.0
    %697 = vmatprep.subr.mxu0 0.0
    %698 = vmatpush1.msra.mxu0 0.0
    %699 = vmatprep.subr.mxu0 0.0
    %700 = vmatpush1.msra.mxu0 0.0
    %701 = vmatprep.subr.mxu0 0.0
    %702 = vmatpush1.msra.mxu0 0.0
    %703 = vmatprep.subr.mxu0 0.0
    %704 = vmatpush1.msra.mxu0 0.0
    %705 = vmatprep.subr.mxu0 0.0
    %706 = vmatpush1.msra.mxu0 0.0
    %707 = vmatprep.subr.mxu0 0.0
    %708 = vmatpush1.msra.mxu0 0.0
    %709 = vmatprep.subr.mxu0 0.0
    %710 = vmatpush1.msra.mxu0 0.0
    %711 = vmatprep.subr.mxu0 0.0
    %712 = vmatpush1.msra.mxu0 0.0
    %713 = vmatprep.subr.mxu0 0.0
    %714 = vmatpush1.msra.mxu0 0.0
    %715 = vmatprep.subr.mxu0 0.0
    %716 = vmatpush1.msra.mxu0 0.0
    %717 = vmatprep.subr.mxu0 0.0
    %718 = vmatpush1.msra.mxu0 0.0
    %719 = vmatprep.subr.mxu0 0.0
    %720 = vmatpush1.msra.mxu0 0.0
    %721 = vmatprep.subr.mxu0 0.0
    %722 = vmatpush1.msra.mxu0 0.0
    %723 = vmatprep.subr.mxu0 0.0
    %724 = vmatpush1.msra.mxu0 0.0
    %725 = vmatprep.subr.mxu0 0.0
    %726 = vmatpush1.msra.mxu0 0.0
    %727 = vmatprep.subr.mxu0 0.0
    %728 = vmatpush1.msra.mxu0 0.0
    %729 = vmatprep.subr.mxu0 0.0
    %730 = vmatpush1.msra.mxu0 0.0
    %731 = vmatprep.subr.mxu0 0.0
    %732 = vmatpush1.msra.mxu0 0.0
    %733 = vmatprep.subr.mxu0 0.0
    %734 = vmatpush1.msra.mxu0 0.0
    %735 = vmatprep.subr.mxu0 0.0
    %736 = vmatpush1.msra.mxu0 0.0
    %737 = vmatprep.mubr.f32.mxu0 0.0
    %738 = vmatmul.mubr.f32.gmra.mrb[0].mxu0 %v671
    %v739 = vpop.f32.mrb[0].mxu0
    %v740 = vadd.f32 0.0, %v739
    %v741 = vpop.f32.mrb[0].mxu0
    %v742 = vadd.f32 0.0, %v741
    %743 = vdwg.mxu0
    %v744 = vadd.f32 %v669, %v740
    %v745 = vadd.f32 %v670, %v742
    %v746 = vxor.u32 %v744, 2147483648
    %v747 = vxor.u32 %v745, 2147483648
    %v748 = vmul.f32 %v746, 1.442695
    %v749 = vpow.pop %v748
    %v750 = vmul.f32 %v747, 1.442695
    %v751 = vpow.pop %v750
    %v752 = vadd.f32 %v749, 1.0
    %v753 = vadd.f32 %v751, 1.0
    %v754 = vrcp.pop %v752
    %v755 = vmul.f32 1.0, %v754
    %v756 = vrcp.pop %v753
    %v757 = vmul.f32 1.0, %v756
    %v758 = vtanh.pop %v745
    %v759 = vmul.f32 %v755, %v657
    %v760 = vmul.f32 %v755, %v758
    %762 = vrot.lane.b32.xlu0 %v760, 64
    %v763 = vpop.permute.xlu0 %762
    %v765 = vadd.f32 %v759, %v763
    %v766 = vtanh.pop %v765
    %v767 = vmul.f32 %v757, %v766
    %769 = vrot.lane.b32.xlu0 %v767, 64
    %v770 = vpop.permute.xlu0 %769
    %s772 = scalar_lea.vmem [#allocation6], 32
    %773 = vst.msk [vmem:[%s772] sm:$0xff] %vm238, %v770
    %s774 = smul.u32 5, 2
    %s775 = smul.addr %s774, 8
    %s776 = scalar_lea.vmem [#allocation2], %s775
    %v777 = vld [vmem:[%s776] sm:$0xff]
    %v778 = vld [vmem:[%s776 + $0x8] sm:$0xff]
    %v779 = vsel %vm238, %v770, 0
    %781 = vmatprep.subr.mxu0 %v218
    %782 = vmatpush1.msra.mxu0 %v217
    %783 = vmatprep.subr.mxu0 %v220
    %784 = vmatpush1.msra.mxu0 %v219
    %785 = vmatprep.subr.mxu0 %v222
    %786 = vmatpush1.msra.mxu0 %v221
    %787 = vmatprep.subr.mxu0 %v224
    %788 = vmatpush1.msra.mxu0 %v223
    %789 = vmatprep.subr.mxu0 %v226
    %790 = vmatpush1.msra.mxu0 %v225
    %791 = vmatprep.subr.mxu0 %v228
    %792 = vmatpush1.msra.mxu0 %v227
    %793 = vmatprep.subr.mxu0 %v230
    %794 = vmatpush1.msra.mxu0 %v229
    %795 = vmatprep.subr.mxu0 %v232
    %796 = vmatpush1.msra.mxu0 %v231
    %797 = vmatprep.subr.mxu0 0.0
    %798 = vmatpush1.msra.mxu0 0.0
    %799 = vmatprep.subr.mxu0 0.0
    %800 = vmatpush1.msra.mxu0 0.0
    %801 = vmatprep.subr.mxu0 0.0
    %802 = vmatpush1.msra.mxu0 0.0
    %803 = vmatprep.subr.mxu0 0.0
    %804 = vmatpush1.msra.mxu0 0.0
    %805 = vmatprep.subr.mxu0 0.0
    %806 = vmatpush1.msra.mxu0 0.0
    %807 = vmatprep.subr.mxu0 0.0
    %808 = vmatpush1.msra.mxu0 0.0
    %809 = vmatprep.subr.mxu0 0.0
    %810 = vmatpush1.msra.mxu0 0.0
    %811 = vmatprep.subr.mxu0 0.0
    %812 = vmatpush1.msra.mxu0 0.0
    %813 = vmatprep.subr.mxu0 0.0
    %814 = vmatpush1.msra.mxu0 0.0
    %815 = vmatprep.subr.mxu0 0.0
    %816 = vmatpush1.msra.mxu0 0.0
    %817 = vmatprep.subr.mxu0 0.0
    %818 = vmatpush1.msra.mxu0 0.0
    %819 = vmatprep.subr.mxu0 0.0
    %820 = vmatpush1.msra.mxu0 0.0
    %821 = vmatprep.subr.mxu0 0.0
    %822 = vmatpush1.msra.mxu0 0.0
    %823 = vmatprep.subr.mxu0 0.0
    %824 = vmatpush1.msra.mxu0 0.0
    %825 = vmatprep.subr.mxu0 0.0
    %826 = vmatpush1.msra.mxu0 0.0
    %827 = vmatprep.subr.mxu0 0.0
    %828 = vmatpush1.msra.mxu0 0.0
    %829 = vmatprep.subr.mxu0 0.0
    %830 = vmatpush1.msra.mxu0 0.0
    %831 = vmatprep.subr.mxu0 0.0
    %832 = vmatpush1.msra.mxu0 0.0
    %833 = vmatprep.subr.mxu0 0.0
    %834 = vmatpush1.msra.mxu0 0.0
    %835 = vmatprep.subr.mxu0 0.0
    %836 = vmatpush1.msra.mxu0 0.0
    %837 = vmatprep.subr.mxu0 0.0
    %838 = vmatpush1.msra.mxu0 0.0
    %839 = vmatprep.subr.mxu0 0.0
    %840 = vmatpush1.msra.mxu0 0.0
    %841 = vmatprep.subr.mxu0 0.0
    %842 = vmatpush1.msra.mxu0 0.0
    %843 = vmatprep.subr.mxu0 0.0
    %844 = vmatpush1.msra.mxu0 0.0
    %845 = vmatprep.mubr.f32.mxu0 0.0
    %846 = vmatmul.mubr.f32.gmra.mrb[0].mxu0 %v779
    %v847 = vpop.f32.mrb[0].mxu0
    %v848 = vadd.f32 0.0, %v847
    %v849 = vpop.f32.mrb[0].mxu0
    %v850 = vadd.f32 0.0, %v849
    %851 = vdwg.mxu0
    %v852 = vadd.f32 %v777, %v848
    %v853 = vadd.f32 %v778, %v850
    %v854 = vxor.u32 %v852, 2147483648
    %v855 = vxor.u32 %v853, 2147483648
    %v856 = vmul.f32 %v854, 1.442695
    %v857 = vpow.pop %v856
    %v858 = vmul.f32 %v855, 1.442695
    %v859 = vpow.pop %v858
    %v860 = vadd.f32 %v857, 1.0
    %v861 = vadd.f32 %v859, 1.0
    %v862 = vrcp.pop %v860
    %v863 = vmul.f32 1.0, %v862
    %v864 = vrcp.pop %v861
    %v865 = vmul.f32 1.0, %v864
    %v866 = vtanh.pop %v853
    %v867 = vmul.f32 %v863, %v765
    %v868 = vmul.f32 %v863, %v866
    %870 = vrot.lane.b32.xlu0 %v868, 64
    %v871 = vpop.permute.xlu0 %870
    %v873 = vadd.f32 %v867, %v871
    %v874 = vtanh.pop %v873
    %v875 = vmul.f32 %v865, %v874
    %877 = vrot.lane.b32.xlu0 %v875, 64
    %v878 = vpop.permute.xlu0 %877
    %s880 = scalar_lea.vmem [#allocation6], 40
    %881 = vst.msk [vmem:[%s880] sm:$0xff] %vm238, %v878
    %s882 = smul.u32 6, 2
    %s883 = smul.addr %s882, 8
    %s884 = scalar_lea.vmem [#allocation2], %s883
    %v885 = vld [vmem:[%s884] sm:$0xff]
    %v886 = vld [vmem:[%s884 + $0x8] sm:$0xff]
    %v887 = vsel %vm238, %v878, 0
    %889 = vmatprep.subr.mxu0 %v218
    %890 = vmatpush1.msra.mxu0 %v217
    %891 = vmatprep.subr.mxu0 %v220
    %892 = vmatpush1.msra.mxu0 %v219
    %893 = vmatprep.subr.mxu0 %v222
    %894 = vmatpush1.msra.mxu0 %v221
    %895 = vmatprep.subr.mxu0 %v224
    %896 = vmatpush1.msra.mxu0 %v223
    %897 = vmatprep.subr.mxu0 %v226
    %898 = vmatpush1.msra.mxu0 %v225
    %899 = vmatprep.subr.mxu0 %v228
    %900 = vmatpush1.msra.mxu0 %v227
    %901 = vmatprep.subr.mxu0 %v230
    %902 = vmatpush1.msra.mxu0 %v229
    %903 = vmatprep.subr.mxu0 %v232
    %904 = vmatpush1.msra.mxu0 %v231
    %905 = vmatprep.subr.mxu0 0.0
    %906 = vmatpush1.msra.mxu0 0.0
    %907 = vmatprep.subr.mxu0 0.0
    %908 = vmatpush1.msra.mxu0 0.0
    %909 = vmatprep.subr.mxu0 0.0
    %910 = vmatpush1.msra.mxu0 0.0
    %911 = vmatprep.subr.mxu0 0.0
    %912 = vmatpush1.msra.mxu0 0.0
    %913 = vmatprep.subr.mxu0 0.0
    %914 = vmatpush1.msra.mxu0 0.0
    %915 = vmatprep.subr.mxu0 0.0
    %916 = vmatpush1.msra.mxu0 0.0
    %917 = vmatprep.subr.mxu0 0.0
    %918 = vmatpush1.msra.mxu0 0.0
    %919 = vmatprep.subr.mxu0 0.0
    %920 = vmatpush1.msra.mxu0 0.0
    %921 = vmatprep.subr.mxu0 0.0
    %922 = vmatpush1.msra.mxu0 0.0
    %923 = vmatprep.subr.mxu0 0.0
    %924 = vmatpush1.msra.mxu0 0.0
    %925 = vmatprep.subr.mxu0 0.0
    %926 = vmatpush1.msra.mxu0 0.0
    %927 = vmatprep.subr.mxu0 0.0
    %928 = vmatpush1.msra.mxu0 0.0
    %929 = vmatprep.subr.mxu0 0.0
    %930 = vmatpush1.msra.mxu0 0.0
    %931 = vmatprep.subr.mxu0 0.0
    %932 = vmatpush1.msra.mxu0 0.0
    %933 = vmatprep.subr.mxu0 0.0
    %934 = vmatpush1.msra.mxu0 0.0
    %935 = vmatprep.subr.mxu0 0.0
    %936 = vmatpush1.msra.mxu0 0.0
    %937 = vmatprep.subr.mxu0 0.0
    %938 = vmatpush1.msra.mxu0 0.0
    %939 = vmatprep.subr.mxu0 0.0
    %940 = vmatpush1.msra.mxu0 0.0
    %941 = vmatprep.subr.mxu0 0.0
    %942 = vmatpush1.msra.mxu0 0.0
    %943 = vmatprep.subr.mxu0 0.0
    %944 = vmatpush1.msra.mxu0 0.0
    %945 = vmatprep.subr.mxu0 0.0
    %946 = vmatpush1.msra.mxu0 0.0
    %947 = vmatprep.subr.mxu0 0.0
    %948 = vmatpush1.msra.mxu0 0.0
    %949 = vmatprep.subr.mxu0 0.0
    %950 = vmatpush1.msra.mxu0 0.0
    %951 = vmatprep.subr.mxu0 0.0
    %952 = vmatpush1.msra.mxu0 0.0
    %953 = vmatprep.mubr.f32.mxu0 0.0
    %954 = vmatmul.mubr.f32.gmra.mrb[0].mxu0 %v887
    %v955 = vpop.f32.mrb[0].mxu0
    %v956 = vadd.f32 0.0, %v955
    %v957 = vpop.f32.mrb[0].mxu0
    %v958 = vadd.f32 0.0, %v957
    %959 = vdwg.mxu0
    %v960 = vadd.f32 %v885, %v956
    %v961 = vadd.f32 %v886, %v958
    %v962 = vxor.u32 %v960, 2147483648
    %v963 = vxor.u32 %v961, 2147483648
    %v964 = vmul.f32 %v962, 1.442695
    %v965 = vpow.pop %v964
    %v966 = vmul.f32 %v963, 1.442695
    %v967 = vpow.pop %v966
    %v968 = vadd.f32 %v965, 1.0
    %v969 = vadd.f32 %v967, 1.0
    %v970 = vrcp.pop %v968
    %v971 = vmul.f32 1.0, %v970
    %v972 = vrcp.pop %v969
    %v973 = vmul.f32 1.0, %v972
    %v974 = vtanh.pop %v961
    %v975 = vmul.f32 %v971, %v873
    %v976 = vmul.f32 %v971, %v974
    %978 = vrot.lane.b32.xlu0 %v976, 64
    %v979 = vpop.permute.xlu0 %978
    %v981 = vadd.f32 %v975, %v979
    %v982 = vtanh.pop %v981
    %v983 = vmul.f32 %v973, %v982
    %985 = vrot.lane.b32.xlu0 %v983, 64
    %v986 = vpop.permute.xlu0 %985
    %s988 = scalar_lea.vmem [#allocation6], 48
    %989 = vst.msk [vmem:[%s988] sm:$0xff] %vm238, %v986
    %s990 = smul.u32 7, 2
    %s991 = smul.addr %s990, 8
    %s992 = scalar_lea.vmem [#allocation2], %s991
    %v993 = vld [vmem:[%s992] sm:$0xff]
    %v994 = vld [vmem:[%s992 + $0x8] sm:$0xff]
    %v995 = vsel %vm238, %v986, 0
    %997 = vmatprep.subr.mxu0 %v218
    %998 = vmatpush1.msra.mxu0 %v217
    %999 = vmatprep.subr.mxu0 %v220
    %1000 = vmatpush1.msra.mxu0 %v219
    %1001 = vmatprep.subr.mxu0 %v222
    %1002 = vmatpush1.msra.mxu0 %v221
    %1003 = vmatprep.subr.mxu0 %v224
    %1004 = vmatpush1.msra.mxu0 %v223
    %1005 = vmatprep.subr.mxu0 %v226
    %1006 = vmatpush1.msra.mxu0 %v225
    %1007 = vmatprep.subr.mxu0 %v228
    %1008 = vmatpush1.msra.mxu0 %v227
    %1009 = vmatprep.subr.mxu0 %v230
    %1010 = vmatpush1.msra.mxu0 %v229
    %1011 = vmatprep.subr.mxu0 %v232
    %1012 = vmatpush1.msra.mxu0 %v231
    %1013 = vmatprep.subr.mxu0 0.0
    %1014 = vmatpush1.msra.mxu0 0.0
    %1015 = vmatprep.subr.mxu0 0.0
    %1016 = vmatpush1.msra.mxu0 0.0
    %1017 = vmatprep.subr.mxu0 0.0
    %1018 = vmatpush1.msra.mxu0 0.0
    %1019 = vmatprep.subr.mxu0 0.0
    %1020 = vmatpush1.msra.mxu0 0.0
    %1021 = vmatprep.subr.mxu0 0.0
    %1022 = vmatpush1.msra.mxu0 0.0
    %1023 = vmatprep.subr.mxu0 0.0
    %1024 = vmatpush1.msra.mxu0 0.0
    %1025 = vmatprep.subr.mxu0 0.0
    %1026 = vmatpush1.msra.mxu0 0.0
    %1027 = vmatprep.subr.mxu0 0.0
    %1028 = vmatpush1.msra.mxu0 0.0
    %1029 = vmatprep.subr.mxu0 0.0
    %1030 = vmatpush1.msra.mxu0 0.0
    %1031 = vmatprep.subr.mxu0 0.0
    %1032 = vmatpush1.msra.mxu0 0.0
    %1033 = vmatprep.subr.mxu0 0.0
    %1034 = vmatpush1.msra.mxu0 0.0
    %1035 = vmatprep.subr.mxu0 0.0
    %1036 = vmatpush1.msra.mxu0 0.0
    %1037 = vmatprep.subr.mxu0 0.0
    %1038 = vmatpush1.msra.mxu0 0.0
    %1039 = vmatprep.subr.mxu0 0.0
    %1040 = vmatpush1.msra.mxu0 0.0
    %1041 = vmatprep.subr.mxu0 0.0
    %1042 = vmatpush1.msra.mxu0 0.0
    %1043 = vmatprep.subr.mxu0 0.0
    %1044 = vmatpush1.msra.mxu0 0.0
    %1045 = vmatprep.subr.mxu0 0.0
    %1046 = vmatpush1.msra.mxu0 0.0
    %1047 = vmatprep.subr.mxu0 0.0
    %1048 = vmatpush1.msra.mxu0 0.0
    %1049 = vmatprep.subr.mxu0 0.0
    %1050 = vmatpush1.msra.mxu0 0.0
    %1051 = vmatprep.subr.mxu0 0.0
    %1052 = vmatpush1.msra.mxu0 0.0
    %1053 = vmatprep.subr.mxu0 0.0
    %1054 = vmatpush1.msra.mxu0 0.0
    %1055 = vmatprep.subr.mxu0 0.0
    %1056 = vmatpush1.msra.mxu0 0.0
    %1057 = vmatprep.subr.mxu0 0.0
    %1058 = vmatpush1.msra.mxu0 0.0
    %1059 = vmatprep.subr.mxu0 0.0
    %1060 = vmatpush1.msra.mxu0 0.0
    %1061 = vmatprep.mubr.f32.mxu0 0.0
    %1062 = vmatmul.mubr.f32.gmra.mrb[0].mxu0 %v995
    %v1063 = vpop.f32.mrb[0].mxu0
    %v1064 = vadd.f32 0.0, %v1063
    %v1065 = vpop.f32.mrb[0].mxu0
    %v1066 = vadd.f32 0.0, %v1065
    %1067 = vdwg.mxu0
    %v1068 = vadd.f32 %v993, %v1064
    %v1069 = vadd.f32 %v994, %v1066
    %v1070 = vxor.u32 %v1068, 2147483648
    %v1071 = vxor.u32 %v1069, 2147483648
    %v1072 = vmul.f32 %v1070, 1.442695
    %v1073 = vpow.pop %v1072
    %v1074 = vmul.f32 %v1071, 1.442695
    %v1075 = vpow.pop %v1074
    %v1076 = vadd.f32 %v1073, 1.0
    %v1077 = vadd.f32 %v1075, 1.0
    %v1078 = vrcp.pop %v1076
    %v1079 = vmul.f32 1.0, %v1078
    %v1080 = vrcp.pop %v1077
    %v1081 = vmul.f32 1.0, %v1080
    %v1082 = vtanh.pop %v1069
    %v1083 = vmul.f32 %v1079, %v981
    %v1084 = vmul.f32 %v1079, %v1082
    %1086 = vrot.lane.b32.xlu0 %v1084, 64
    %v1087 = vpop.permute.xlu0 %1086
    %v1089 = vadd.f32 %v1083, %v1087
    %v1090 = vtanh.pop %v1089
    %v1091 = vmul.f32 %v1081, %v1090
    %1093 = vrot.lane.b32.xlu0 %v1091, 64
    %v1094 = vpop.permute.xlu0 %1093
    %s1096 = scalar_lea.vmem [#allocation6], 56
    %1097 = vst.msk [vmem:[%s1096] sm:$0xff] %vm238, %v1094
    %1099 = vrot.lane.b32.xlu0 %v1089, 64
    %v1100 = vpop.permute.xlu0 %1099
    %1102 = vst.msk [vmem:[#allocation7] sm:$0xff] %vm238, %v1100
    // Predicated region
    $region22: #{tpu_custom_call.1} parent=1 // pred_check
      _
    $region23: #{tpu_custom_call.1} parent=1 // pred_check_branch
      %1104 = sbr.rel (0) target = $region25
    $region24: #{tpu_custom_call.1} parent=1 // pred_region
      %s1106 = ssub.s32 1024, 1024
      %1107 = vsyncadd [#allocation5], %s1106
      %s1108 = sshll.u32 [#allocation6], 4
      %s1109 = int_to_ptr.vmem [resolvable:$true] %s1108
      %1114 = dma.vmem_to_hbm [thread:$0]  %s1109, 1024, %s4, [#allocation5], 128, 128, 8
    $region25: #{tpu_custom_call.1} parent=1 // pred_fallthru
      _
    // Predicated region
    $region26: #{tpu_custom_call.1} parent=1 // pred_check
      _
    $region27: #{tpu_custom_call.1} parent=1 // pred_check_branch
      %1116 = sbr.rel (0) target = $region29
    $region28: #{tpu_custom_call.1} parent=1 // pred_region
      %s1118 = ssub.s32 128, 128
      %1119 = vsyncadd [#allocation8], %s1118
      %s1121 = sshll.u32 [#allocation7], 4
      %s1122 = int_to_ptr.vmem [resolvable:$true] %s1121
      %1124 = dma.vmem_to_hbm [thread:$0]  %s1122, 128, %s5, [#allocation8]
    $region29: #{tpu_custom_call.1} parent=1 // pred_fallthru
      _
    // Predicated region
    $region30: #{tpu_custom_call.1} parent=1 // pred_check
      _
    $region31: #{tpu_custom_call.1} parent=1 // pred_check_branch
      %1126 = sbr.rel (0) target = $region33
    $region32: #{tpu_custom_call.1} parent=1 // pred_region
      %1127 = dma.done [#allocation5], 1024
    $region33: #{tpu_custom_call.1} parent=1 // pred_fallthru
      _
    // Predicated region
    $region34: #{tpu_custom_call.1} parent=1 // pred_check
      _
    $region35: #{tpu_custom_call.1} parent=1 // pred_check_branch
      %1129 = sbr.rel (0) target = $region37
    $region36: #{tpu_custom_call.1} parent=1 // pred_region
      %1130 = dma.done [#allocation8], 128
    $region37: #{tpu_custom_call.1} parent=1 // pred_fallthru
      _
    %1131 = vsyncpa [#allocation4], 1
    %1132 = vsyncpa [#allocation5], 1
    %1133 = vsyncpa [#allocation8], 1

</llo_original>
